<compile_context>
chip_gen: v5e
topology: v5e:2x2
jax: 0.10.0
libtpu: 0.0.40
codegen_flags: <defaults>
</compile_context>

<pallas_src>
import functools
import warnings

import numpy as np
import jax
import jax.numpy as jnp
from jax import lax
from jax.experimental import pallas as pl
from jax.experimental.pallas import tpu as pltpu


_NEG_FILL = -1e9  # padding value that is exactly inert through exp / log1p / max


def _round_up(x, m):
    return ((x + m - 1) // m) * m


def _pad2d(a, rows, cols, fill=0.0):
    r, c = a.shape
    return jnp.pad(a, ((0, rows - r), (0, cols - c)), constant_values=fill)


def _choose_point_tiling(num_points, point_tile_max=2048):
    """Pick (padded P, point tile, #tiles): tile <= point_tile_max, multiple of 128,
    minimal padding (e.g. P=12544 -> TP=1792, 7 tiles, zero waste)."""
    Pp = _round_up(max(num_points, 128), 128)
    n_p = -(-Pp // point_tile_max)                 # cdiv
    tp = _round_up(-(-Pp // n_p), 128)
    return n_p * tp, tp, n_p


# ---------------------------------------------------------------------------
# Pallas kernel: per-image instance-matching cost matrix.
#   grid = (bs, P_tiles); bs is "parallel", P is an "arbitrary" reduction axis with
#   VMEM f32 scratch accumulators (init at p==0, combine/write at p==last).
# ---------------------------------------------------------------------------
def _cost_kernel(cost_class, cost_mask, cost_dice, inv_P,
                 logits_ref, onehot_t_ref, pred_pts_ref, tgt_pts_t_ref, tgt_sum_ref,
                 cost_ref,
                 xt_acc, st_acc, nsum_acc, ssum_acc):
    # logits_ref    : [1, nqp, ncp]  class logits           (pads = -1e9)   f32
    # onehot_t_ref  : [1, ncp, ntp]  one-hot(tgt_ids)^T      (pads = 0)      bf16
    # pred_pts_ref  : [1, nqp, TP ]  sampled pred mask logits (pads = -1e9)  f32
    # tgt_pts_t_ref : [1, TP,  ntp]  sampled target masks^T   (pads = 0)     bf16
    # tgt_sum_ref   : [1, 1,   ntp]  per-target point sums    (pads = 0)     f32
    # cost_ref      : [1, nqp, ntp]
    p = pl.program_id(1)
    np_tiles = pl.num_programs(1)
    dn = (((1,), (0,)), ((), ()))  # [M,K] x [K,N] -> [M,N]

    @pl.when(p == 0)
    def _():
        xt_acc[...] = jnp.zeros_like(xt_acc)
        st_acc[...] = jnp.zeros_like(st_acc)
        nsum_acc[...] = jnp.zeros_like(nsum_acc)
        ssum_acc[...] = jnp.zeros_like(ssum_acc)

    x = pred_pts_ref[0]                                    # [nqp, TP] f32
    t = tgt_pts_t_ref[0].astype(jnp.float32)               # [TP, ntp] bf16 -> f32 in VMEM

    # BCE-with-logits pieces on this point tile:
    #   neg = max(x,0) + log1p(exp(-|x|));  pos = neg - x
    #   => (pos @ t + neg @ (1-t)) / P == (row_sum(neg) - x @ t) / P
    e_negabs = jnp.exp(-jnp.abs(x))
    neg = jnp.maximum(x, 0.0) + jnp.log1p(e_negabs)
    # exact, overflow-free sigmoid reusing exp(-|x|)
    sig = jnp.where(x >= 0.0, 1.0, e_negabs) / (1.0 + e_negabs)

    # Fused matmul: one pass of RHS t computes both x@t and sig@t (2x MXU rows).
    nq = x.shape[0]
    both = lax.dot_general(jnp.concatenate([x, sig], axis=0), t, dn,
                           preferred_element_type=jnp.float32)       # [2*nqp, ntp]
    xt_acc[...] += both[:nq]
    st_acc[...] += both[nq:]
    nsum_acc[...] += jnp.sum(neg, axis=-1, keepdims=True)            # [nqp, 1]
    ssum_acc[...] += jnp.sum(sig, axis=-1, keepdims=True)            # [nqp, 1]

    @pl.when(p == np_tiles - 1)
    def _():
        # Class cost hoisted out of the P loop; logits/onehot blocks are p-invariant so
        # they were DMA'd once per image and are still resident in VMEM here.
        logits = logits_ref[0]                                       # [nqp, ncp]
        m = jnp.max(logits, axis=-1, keepdims=True)
        e = jnp.exp(logits - m)
        prob = e / jnp.sum(e, axis=-1, keepdims=True)                # exact division
        c_class = -lax.dot_general(prob, onehot_t_ref[0].astype(jnp.float32), dn,
                                   preferred_element_type=jnp.float32)

        c_ce = (nsum_acc[...] - xt_acc[...]) * inv_P
        c_dice = 1.0 - (2.0 * st_acc[...] + 1.0) / (ssum_acc[...] + tgt_sum_ref[0] + 1.0)

        cost_ref[0] = cost_mask * c_ce + cost_class * c_class + cost_dice * c_dice


def compute_cost_matrices(logits_b, onehot_t_b, pred_pts_b, tgt_pts_t_b, tgt_sum_b, *,
                          num_points, point_tile,
                          cost_class=1.0, cost_mask=1.0, cost_dice=1.0):
    """Single pallas_call over the whole batch.

    Inputs are pre-padded & stacked:
        logits_b    [bs, nqp, ncp] f32     onehot_t_b  [bs, ncp, ntp] bf16
        pred_pts_b  [bs, nqp, Pp ] f32     tgt_pts_t_b [bs, Pp,  ntp] bf16
        tgt_sum_b   [bs, 1,   ntp] f32
    Returns cost [bs, nqp, ntp]; padded rows/cols are finite garbage — MUST be sliced off
    on host before linear_sum_assignment.
    """
    bs, nqp, ncp = logits_b.shape
    ntp = onehot_t_b.shape[-1]
    Pp = pred_pts_b.shape[-1]
    assert Pp % point_tile == 0, "padded point dim must be a multiple of the point tile"
    TP = point_tile
    n_p = Pp // TP

    kernel = functools.partial(_cost_kernel, float(cost_class), float(cost_mask),
                               float(cost_dice), 1.0 / float(num_points))

    # Explicit VMEM budget (review: scoped defaults are 16/32 MiB; v7x physical is 64 MiB).
    block_bytes = (nqp * ncp * 4 + ncp * ntp * onehot_t_b.dtype.itemsize
                   + nqp * TP * 4 + TP * ntp * tgt_pts_t_b.dtype.itemsize
                   + ntp * 4 + nqp * ntp * 4)
    scratch_bytes = (2 * nqp * ntp + 2 * nqp * 128) * 4
    vmem_limit = int(min(64 * 1024 * 1024,
                         max(32 * 1024 * 1024, 3 * block_bytes + 2 * scratch_bytes)))

    return pl.pallas_call(
        kernel,
        out_shape=jax.ShapeDtypeStruct((bs, nqp, ntp), jnp.float32),
        grid_spec=pltpu.PrefetchScalarGridSpec(
            num_scalar_prefetch=0,
            grid=(bs, n_p),
            in_specs=[
                pl.BlockSpec((1, nqp, ncp), lambda b, p: (b, 0, 0)),   # p-invariant
                pl.BlockSpec((1, ncp, ntp), lambda b, p: (b, 0, 0)),   # p-invariant
                pl.BlockSpec((1, nqp, TP), lambda b, p: (b, 0, p)),
                pl.BlockSpec((1, TP, ntp), lambda b, p: (b, p, 0)),
                pl.BlockSpec((1, 1, ntp), lambda b, p: (b, 0, 0)),     # p-invariant
            ],
            out_specs=pl.BlockSpec((1, nqp, ntp), lambda b, p: (b, 0, 0)),
            scratch_shapes=[
                pltpu.VMEM((nqp, ntp), jnp.float32),   # x @ t accumulator
                pltpu.VMEM((nqp, ntp), jnp.float32),   # sigmoid(x) @ t accumulator
                pltpu.VMEM((nqp, 1), jnp.float32),     # row_sum(neg) accumulator
                pltpu.VMEM((nqp, 1), jnp.float32),     # row_sum(sigmoid) accumulator
            ],
        ),
        compiler_params=pltpu.CompilerParams(
            dimension_semantics=("parallel", "arbitrary"),
            vmem_limit_bytes=vmem_limit,
        ),
    )(logits_b, onehot_t_b, pred_pts_b, tgt_pts_t_b, tgt_sum_b)


# ---------------------------------------------------------------------------
# Glue: point_sample (grid_sample bilinear, align_corners=False, zero padding)
# ---------------------------------------------------------------------------
def point_sample(masks, points):
    # masks: [N, H, W] float ; points: [P, 2] in [0,1], (x, y) order like grid_sample
    N, H, W = masks.shape
    x = points[:, 0] * W - 0.5
    y = points[:, 1] * H - 0.5
    x0 = jnp.floor(x)
    y0 = jnp.floor(y)
    x1 = x0 + 1.0
    y1 = y0 + 1.0
    wx1 = x - x0
    wx0 = 1.0 - wx1
    wy1 = y - y0
    wy0 = 1.0 - wy1

    def gather(xi, yi):
        valid = ((xi >= 0) & (xi < W) & (yi >= 0) & (yi < H)).astype(masks.dtype)
        xi_c = jnp.clip(xi, 0, W - 1).astype(jnp.int32)
        yi_c = jnp.clip(yi, 0, H - 1).astype(jnp.int32)
        return masks[:, yi_c, xi_c] * valid[None, :]

    return (gather(x0, y0) * (wx0 * wy0)[None, :]
            + gather(x1, y0) * (wx1 * wy0)[None, :]
            + gather(x0, y1) * (wx0 * wy1)[None, :]
            + gather(x1, y1) * (wx1 * wy1)[None, :])


# ---------------------------------------------------------------------------
# Glue: Hungarian assignment (no Pallas/TPU equivalent — runs on host, like the original)
# ---------------------------------------------------------------------------
def linear_sum_assignment_np(C):
    # TODO(synk): scipy's Hungarian solve has no Pallas equivalent; runs on host.
    try:
        from scipy.optimize import linear_sum_assignment
    except ImportError:
        warnings.warn("scipy unavailable: falling back to a greedy (non-optimal) matching "
                      "that diverges from the PyTorch reference.")
        C = C.copy()
        nq, nt = C.shape
        rows, cols = [], []
        for _ in range(min(nq, nt)):
            r, c = np.unravel_index(np.argmin(C), C.shape)
            rows.append(r)
            cols.append(c)
            C[r, :] = np.inf
            C[:, c] = np.inf
        order = np.argsort(rows)
        return (np.asarray(rows, np.int64)[order], np.asarray(cols, np.int64)[order])
    r, c = linear_sum_assignment(C)
    return np.asarray(r, np.int64), np.asarray(c, np.int64)


# ---------------------------------------------------------------------------
# HungarianMatcher.forward / memory_efficient_forward equivalent (batched dispatch)
# ---------------------------------------------------------------------------
def hungarian_matcher_forward(outputs, ref_targets, tar_targets, *,
                              cost_class=1.0, cost_mask=1.0, cost_dice=1.0,
                              num_points=128, point_tile_max=2048, key=None):
    if key is None:
        key = jax.random.PRNGKey(0)
    bs = len(outputs)
    nq, nc = outputs[0]['pred_ins_logits'].shape[1:3]
    nt_list = [int(t['labels_t'].shape[0]) for t in tar_targets]

    # Fixed, lane/sublane-friendly pad sizes (also act as compile buckets).
    nqp = _round_up(max(nq, 8), 8)
    ncp = _round_up(max(nc, 128), 128)
    ntp = _round_up(max(max(nt_list), 128), 128)
    Pp, TP, _ = _choose_point_tiling(num_points, point_tile_max)

    # One RNG draw for the whole batch (still per-image random points, as in the original).
    point_coords = jax.random.uniform(key, (bs, num_points, 2), dtype=jnp.float32)

    # ---- prediction side: same shape per image -> stack once, vmap, pad once -----------
    logits = jnp.stack([o['pred_ins_logits'][0] for o in outputs]).astype(jnp.float32)
    pred_masks = jnp.stack([o['pred_ins_masks'][0] for o in outputs]).astype(jnp.float32)
    pred_pts = jax.vmap(point_sample)(pred_masks, point_coords)               # [bs, nq, P]
    logits_b = jnp.pad(logits, ((0, 0), (0, nqp - nq), (0, ncp - nc)),
                       constant_values=_NEG_FILL)
    pred_pts_b = jnp.pad(pred_pts, ((0, 0), (0, nqp - nq), (0, Pp - num_points)),
                         constant_values=_NEG_FILL)

    # ---- target side: ragged nt (and possibly spatial size) -> per image ----------------
    # TODO(synk): bucket/concatenate targets across the batch to reduce host dispatch.
    onehot_t_b, tgt_pts_t_b, tgt_sum_b = [], [], []
    for b in range(bs):
        nt = nt_list[b]
        tgt_ids = tar_targets[b]['labels_t']
        tgt_mask = tar_targets[b]['masks'].astype(jnp.float32)
        tgt_pts = point_sample(tgt_mask, point_coords[b])                     # [nt, P] f32
        onehot = jax.nn.one_hot(tgt_ids, nc, dtype=jnp.float32)               # [nt, nc]
        # Binary/one-hot operands stored bf16 (lossless for {0,1}); halves the DMA of the
        # largest kernel input.  tgt_sum is precomputed in f32 before the downcast.
        onehot_t_b.append(_pad2d(onehot.T, ncp, ntp).astype(jnp.bfloat16))    # [ncp, ntp]
        tgt_pts_t_b.append(_pad2d(tgt_pts.T, Pp, ntp).astype(jnp.bfloat16))   # [Pp, ntp]
        tgt_sum_b.append(jnp.pad(jnp.sum(tgt_pts, axis=-1), (0, ntp - nt))[None, :])

    C = compute_cost_matrices(
        logits_b, jnp.stack(onehot_t_b), pred_pts_b, jnp.stack(tgt_pts_t_b),
        jnp.stack(tgt_sum_b),
        num_points=num_points, point_tile=TP,
        cost_class=cost_class, cost_mask=cost_mask, cost_dice=cost_dice)
    C_np = np.asarray(jax.block_until_ready(C))  # single D2H copy for the whole batch

    indices_id, indices_ins = [], []
    for b in range(bs):
        # IMPORTANT: padded rows/cols contain finite garbage; they MUST be sliced off here
        # so linear_sum_assignment can never select them.
        C_b = C_np[b, :nq, :nt_list[b]]
        assert np.all(np.isfinite(C_b)), "non-finite matching costs"
        indices_ins.append(linear_sum_assignment_np(C_b))

        # id matching (pure index bookkeeping, host-side like the original)
        ref_ids = np.asarray(ref_targets[b]['ids'])
        tar_ids = np.asarray(tar_targets[b]['ids'])
        tar_flag = np.isin(tar_ids, ref_ids)
        inter = tar_ids[tar_flag]
        idx_tar = np.where(tar_flag)[0].astype(np.int64)
        idx_ref = np.where(np.isin(ref_ids, inter))[0].astype(np.int64)
        indices_id.append((idx_ref, idx_tar))
    return indices_id, indices_ins


# ---------------------------------------------------------------------------
# Pure-JAX reference for the kernel (correctness check)
# ---------------------------------------------------------------------------
def _cost_reference(logits, tgt_ids, x, t, cc, cm, cd):
    prob = jax.nn.softmax(logits, axis=-1)
    c_class = -prob[:, tgt_ids]
    P = x.shape[-1]
    pos = jnp.maximum(x, 0) - x + jnp.log1p(jnp.exp(-jnp.abs(x)))
    neg = jnp.maximum(x, 0) + jnp.log1p(jnp.exp(-jnp.abs(x)))
    c_ce = (pos @ t.T + neg @ (1 - t).T) / P
    sig = jax.nn.sigmoid(x)
    c_dice = 1 - (2 * (sig @ t.T) + 1) / (sig.sum(-1)[:, None] + t.sum(-1)[None, :] + 1)
    return cm * c_ce + cc * c_class + cd * c_dice


if __name__ == "__main__":
    key = jax.random.PRNGKey(0)
    bs, nq, nc, H, W = 2, 16, 8, 16, 16
    nts = [6, 5]  # variable target counts per image

    # ---- standalone batched-kernel correctness vs pure-JAX reference -------------------
    # P_test=256 with a 128-point tile forces 2 P-tiles, exercising the accumulator path.
    P_test = 256
    nqp = _round_up(max(nq, 8), 8)
    ncp = _round_up(max(nc, 128), 128)
    ntp = _round_up(max(max(nts), 128), 128)
    Pp, TP, n_p = _choose_point_tiling(P_test, point_tile_max=128)
    assert n_p == 2

    logits_b, onehot_t_b, pred_pts_b, tgt_pts_t_b, tgt_sum_b, raw = [], [], [], [], [], []
    for b in range(bs):
        key, ka, kb, kc, kd = jax.random.split(key, 5)
        nt = nts[b]
        lg = jax.random.normal(ka, (nq, nc), jnp.float32)
        ids = jax.random.randint(kb, (nt,), 0, nc)
        pp = jax.random.normal(kc, (nq, P_test), jnp.float32)
        tp = (jax.random.uniform(kd, (nt, P_test)) > 0.5).astype(jnp.float32)
        raw.append((lg, ids, pp, tp))
        oh = jax.nn.one_hot(ids, nc, dtype=jnp.float32)
        logits_b.append(_pad2d(lg, nqp, ncp, _NEG_FILL))
        pred_pts_b.append(_pad2d(pp, nqp, Pp, _NEG_FILL))
        onehot_t_b.append(_pad2d(oh.T, ncp, ntp).astype(jnp.bfloat16))
        tgt_pts_t_b.append(_pad2d(tp.T, Pp, ntp).astype(jnp.bfloat16))
        tgt_sum_b.append(jnp.pad(jnp.sum(tp, axis=-1), (0, ntp - nt))[None, :])

    C = jax.block_until_ready(compute_cost_matrices(
        jnp.stack(logits_b), jnp.stack(onehot_t_b), jnp.stack(pred_pts_b),
        jnp.stack(tgt_pts_t_b), jnp.stack(tgt_sum_b),
        num_points=P_test, point_tile=TP))
    for b in range(bs):
        lg, ids, pp, tp = raw[b]
        want = _cost_reference(lg, ids, pp, tp, 1.0, 1.0, 1.0)
        got = np.asarray(C[b, :nq, :nts[b]])
        np.testing.assert_allclose(got, np.asarray(want), rtol=2e-3, atol=2e-3)

    # ---- full matcher forward on synthetic inputs ---------------------------------------
    outputs, ref_targets, tar_targets = [], [], []
    for b in range(bs):
        key, k1, k2, k3, k4 = jax.random.split(key, 5)
        nt = nts[b]
        outputs.append({
            'pred_ins_logits': jax.random.normal(k1, (1, nq, nc), jnp.float32),
            'pred_ins_masks': jax.random.normal(k2, (1, nq, H, W), jnp.float32),
        })
        tar_targets.append({
            'labels_t': jax.random.randint(k3, (nt,), 0, nc),
            'masks': (jax.random.uniform(k4, (nt, H, W)) > 0.5).astype(jnp.float32),
            'ids': jnp.arange(nt, dtype=jnp.int32) + b,
        })
        ref_targets.append({'ids': jnp.arange(nt, dtype=jnp.int32)})

    indices_id, indices_ins = hungarian_matcher_forward(
        outputs, ref_targets, tar_targets,
        cost_class=1.0, cost_mask=1.0, cost_dice=1.0,
        num_points=128, key=jax.random.PRNGKey(42))

    assert len(indices_id) == bs and len(indices_ins) == bs
    for b, (i, j) in enumerate(indices_ins):
        assert len(i) == len(j) == min(nq, nts[b])
    print("KERNEL_OK")
</pallas_src>

<mosaic_0001>
module attributes {stable_mosaic.version = 11 : i64} {
  func.func @_cost_kernel(%arg0: i32, %arg1: i32, %arg2: memref<1x16x128xf32, #tpu.memory_space<vmem>>, %arg3: memref<1x128x128xbf16, #tpu.memory_space<vmem>>, %arg4: memref<1x16x128xf32, #tpu.memory_space<vmem>>, %arg5: memref<1x128x128xbf16, #tpu.memory_space<vmem>>, %arg6: memref<1x1x128xf32, #tpu.memory_space<vmem>>, %arg7: memref<1x16x128xf32, #tpu.memory_space<vmem>>, %arg8: memref<16x128xf32, #tpu.memory_space<vmem>>, %arg9: memref<16x128xf32, #tpu.memory_space<vmem>>, %arg10: memref<16x1xf32, #tpu.memory_space<vmem>>, %arg11: memref<16x1xf32, #tpu.memory_space<vmem>>) attributes {dimension_semantics = [#tpu.dimension_semantics<parallel>, #tpu.dimension_semantics<arbitrary>], iteration_bounds = array<i64: 2, 2>, scalar_prefetch = 0 : i64, scratch_operands = 4 : i64, tpu.core_type = #tpu.core_type<tc>, window_params = [{transform_indices = @transform_0, window_bounds = array<i64: 1, 16, 128>}, {transform_indices = @transform_1, window_bounds = array<i64: 1, 128, 128>}, {transform_indices = @transform_2, window_bounds = array<i64: 1, 16, 128>}, {transform_indices = @transform_3, window_bounds = array<i64: 1, 128, 128>}, {transform_indices = @transform_4, window_bounds = array<i64: 1, 1, 128>}, {transform_indices = @transform_5, window_bounds = array<i64: 1, 16, 128>}]} {
    %c0_i32 = arith.constant 0 : i32
    %0 = arith.cmpi eq, %arg1, %c0_i32 : i32
    %1 = arith.extui %0 : i1 to i32
    %c0_i32_0 = arith.constant 0 : i32
    %2 = arith.cmpi ne, %1, %c0_i32_0 : i32
    scf.if %2 {
      %cst_30 = arith.constant 0.000000e+00 : f32
      %46 = vector.broadcast %cst_30 : f32 to vector<16x128xf32>
      %c0_31 = arith.constant 0 : index
      %c0_32 = arith.constant 0 : index
      %47 = vector.load %arg8[%c0_31, %c0_32] : memref<16x128xf32, #tpu.memory_space<vmem>>, vector<16x128xf32>
      tpu.vector_store %arg8[%c0_31, %c0_32], %46 {strides = array<i32>} : memref<16x128xf32, #tpu.memory_space<vmem>>, vector<16x128xf32>,
      %cst_33 = arith.constant 0.000000e+00 : f32
      %48 = vector.broadcast %cst_33 : f32 to vector<16x128xf32>
      %c0_34 = arith.constant 0 : index
      %c0_35 = arith.constant 0 : index
      %49 = vector.load %arg9[%c0_34, %c0_35] : memref<16x128xf32, #tpu.memory_space<vmem>>, vector<16x128xf32>
      tpu.vector_store %arg9[%c0_34, %c0_35], %48 {strides = array<i32>} : memref<16x128xf32, #tpu.memory_space<vmem>>, vector<16x128xf32>,
      %cst_36 = arith.constant 0.000000e+00 : f32
      %50 = vector.broadcast %cst_36 : f32 to vector<16x1xf32>
      %c0_37 = arith.constant 0 : index
      %c0_38 = arith.constant 0 : index
      %51 = vector.load %arg10[%c0_37, %c0_38] : memref<16x1xf32, #tpu.memory_space<vmem>>, vector<16x1xf32>
      tpu.vector_store %arg10[%c0_37, %c0_38], %50 {strides = array<i32>} : memref<16x1xf32, #tpu.memory_space<vmem>>, vector<16x1xf32>,
      %cst_39 = arith.constant 0.000000e+00 : f32
      %52 = vector.broadcast %cst_39 : f32 to vector<16x1xf32>
      %c0_40 = arith.constant 0 : index
      %c0_41 = arith.constant 0 : index
      %53 = vector.load %arg11[%c0_40, %c0_41] : memref<16x1xf32, #tpu.memory_space<vmem>>, vector<16x1xf32>
      tpu.vector_store %arg11[%c0_40, %c0_41], %52 {strides = array<i32>} : memref<16x1xf32, #tpu.memory_space<vmem>>, vector<16x1xf32>,
    } else {
    }
    %c0 = arith.constant 0 : index
    %c0_1 = arith.constant 0 : index
    %c0_2 = arith.constant 0 : index
    %3 = vector.load %arg4[%c0, %c0_1, %c0_2] : memref<1x16x128xf32, #tpu.memory_space<vmem>>, vector<1x16x128xf32>
    %4 = vector.shape_cast %3 : vector<1x16x128xf32> to vector<16x128xf32>
    %c0_3 = arith.constant 0 : index
    %c0_4 = arith.constant 0 : index
    %c0_5 = arith.constant 0 : index
    %5 = vector.load %arg5[%c0_3, %c0_4, %c0_5] : memref<1x128x128xbf16, #tpu.memory_space<vmem>>, vector<1x128x128xbf16>
    %6 = vector.shape_cast %5 : vector<1x128x128xbf16> to vector<128x128xbf16>
    %7 = arith.extf %6 : vector<128x128xbf16> to vector<128x128xf32>
    %8 = math.absf %4 : vector<16x128xf32>
    %cst = arith.constant 0.000000e+00 : f32
    %9 = vector.broadcast %cst : f32 to vector<16x128xf32>
    %10 = arith.subf %9, %8 : vector<16x128xf32>
    %11 = math.exp %10 : vector<16x128xf32>
    %cst_6 = arith.constant 0.000000e+00 : f32
    %12 = vector.broadcast %cst_6 : f32 to vector<16x128xf32>
    %13 = arith.maximumf %4, %12 : vector<16x128xf32>
    %14 = math.log1p %11 : vector<16x128xf32>
    %15 = arith.addf %13, %14 : vector<16x128xf32>
    %cst_7 = arith.constant 0.000000e+00 : f32
    %16 = vector.broadcast %cst_7 : f32 to vector<16x128xf32>
    %17 = arith.cmpf oge, %4, %16 : vector<16x128xf32>
    %cst_8 = arith.constant 1.000000e+00 : f32
    %18 = vector.broadcast %cst_8 : f32 to vector<16x128xf32>
    %19 = arith.select %17, %18, %11 : vector<16x128xi1>, vector<16x128xf32>
    %cst_9 = arith.constant 1.000000e+00 : f32
    %20 = vector.broadcast %cst_9 : f32 to vector<16x128xf32>
    %21 = arith.addf %20, %11 : vector<16x128xf32>
    %22 = arith.divf %19, %21 : vector<16x128xf32>
    %23 = tpu.concatenate %4, %22 in 0 : vector<16x128xf32>, vector<16x128xf32> -> vector<32x128xf32>
    %cst_10 = arith.constant dense<0.000000e+00> : vector<32x128xf32>
    %24 = tpu.matmul %23, %7, %cst_10 {dimension_numbers = #tpu.dot_dimension_numbers<[1], [0], [0], [1], [0, 0, 1, 1], [], []>} : vector<32x128xf32>, vector<128x128xf32>, vector<32x128xf32> -> vector<32x128xf32>
    %c0_11 = arith.constant 0 : index
    %c0_12 = arith.constant 0 : index
    %25 = vector.load %arg8[%c0_11, %c0_12] : memref<16x128xf32, #tpu.memory_space<vmem>>, vector<16x128xf32>
    %26 = vector.extract_strided_slice %24 {offsets = [0, 0], sizes = [16, 128], strides = [1, 1]} : vector<32x128xf32> to vector<16x128xf32>
    %27 = arith.addf %25, %26 : vector<16x128xf32>
    %c0_13 = arith.constant 0 : index
    %c0_14 = arith.constant 0 : index
    %28 = vector.load %arg8[%c0_13, %c0_14] : memref<16x128xf32, #tpu.memory_space<vmem>>, vector<16x128xf32>
    tpu.vector_store %arg8[%c0_13, %c0_14], %27 {strides = array<i32>} : memref<16x128xf32, #tpu.memory_space<vmem>>, vector<16x128xf32>,
    %c0_15 = arith.constant 0 : index
    %c0_16 = arith.constant 0 : index
    %29 = vector.load %arg9[%c0_15, %c0_16] : memref<16x128xf32, #tpu.memory_space<vmem>>, vector<16x128xf32>
    %30 = vector.extract_strided_slice %24 {offsets = [16, 0], sizes = [16, 128], strides = [1, 1]} : vector<32x128xf32> to vector<16x128xf32>
    %31 = arith.addf %29, %30 : vector<16x128xf32>
    %c0_17 = arith.constant 0 : index
    %c0_18 = arith.constant 0 : index
    %32 = vector.load %arg9[%c0_17, %c0_18] : memref<16x128xf32, #tpu.memory_space<vmem>>, vector<16x128xf32>
    tpu.vector_store %arg9[%c0_17, %c0_18], %31 {strides = array<i32>} : memref<16x128xf32, #tpu.memory_space<vmem>>, vector<16x128xf32>,
    %c0_19 = arith.constant 0 : index
    %c0_20 = arith.constant 0 : index
    %33 = vector.load %arg10[%c0_19, %c0_20] : memref<16x1xf32, #tpu.memory_space<vmem>>, vector<16x1xf32>
    %cst_21 = arith.constant dense<0.000000e+00> : vector<16xf32>
    %34 = vector.multi_reduction <add>, %15, %cst_21 [1] : vector<16x128xf32> to vector<16xf32>
    %35 = vector.shape_cast %34 : vector<16xf32> to vector<16x1xf32>
    %36 = arith.addf %33, %35 : vector<16x1xf32>
    %c0_22 = arith.constant 0 : index
    %c0_23 = arith.constant 0 : index
    %37 = vector.load %arg10[%c0_22, %c0_23] : memref<16x1xf32, #tpu.memory_space<vmem>>, vector<16x1xf32>
    tpu.vector_store %arg10[%c0_22, %c0_23], %36 {strides = array<i32>} : memref<16x1xf32, #tpu.memory_space<vmem>>, vector<16x1xf32>,
    %c0_24 = arith.constant 0 : index
    %c0_25 = arith.constant 0 : index
    %38 = vector.load %arg11[%c0_24, %c0_25] : memref<16x1xf32, #tpu.memory_space<vmem>>, vector<16x1xf32>
    %cst_26 = arith.constant dense<0.000000e+00> : vector<16xf32>
    %39 = vector.multi_reduction <add>, %22, %cst_26 [1] : vector<16x128xf32> to vector<16xf32>
    %40 = vector.shape_cast %39 : vector<16xf32> to vector<16x1xf32>
    %41 = arith.addf %38, %40 : vector<16x1xf32>
    %c0_27 = arith.constant 0 : index
    %c0_28 = arith.constant 0 : index
    %42 = vector.load %arg11[%c0_27, %c0_28] : memref<16x1xf32, #tpu.memory_space<vmem>>, vector<16x1xf32>
    tpu.vector_store %arg11[%c0_27, %c0_28], %41 {strides = array<i32>} : memref<16x1xf32, #tpu.memory_space<vmem>>, vector<16x1xf32>,
    %c1_i32 = arith.constant 1 : i32
    %43 = arith.cmpi eq, %arg1, %c1_i32 : i32
    %44 = arith.extui %43 : i1 to i32
    %c0_i32_29 = arith.constant 0 : i32
    %45 = arith.cmpi ne, %44, %c0_i32_29 : i32
    scf.if %45 {
      %c0_30 = arith.constant 0 : index
      %c0_31 = arith.constant 0 : index
      %c0_32 = arith.constant 0 : index
      %46 = vector.load %arg2[%c0_30, %c0_31, %c0_32] : memref<1x16x128xf32, #tpu.memory_space<vmem>>, vector<1x16x128xf32>
      %47 = vector.shape_cast %46 : vector<1x16x128xf32> to vector<16x128xf32>
      %cst_33 = arith.constant dense<0xFF800000> : vector<16xf32>
      %48 = vector.multi_reduction <maximumf>, %47, %cst_33 [1] : vector<16x128xf32> to vector<16xf32>
      %49 = vector.shape_cast %48 : vector<16xf32> to vector<16x1xf32>
      %50 = vector.broadcast %49 : vector<16x1xf32> to vector<16x128xf32>
      %51 = arith.subf %47, %50 : vector<16x128xf32>
      %52 = math.exp %51 : vector<16x128xf32>
      %cst_34 = arith.constant dense<0.000000e+00> : vector<16xf32>
      %53 = vector.multi_reduction <add>, %52, %cst_34 [1] : vector<16x128xf32> to vector<16xf32>
      %54 = vector.shape_cast %53 : vector<16xf32> to vector<16x1xf32>
      %55 = vector.broadcast %54 : vector<16x1xf32> to vector<16x128xf32>
      %56 = arith.divf %52, %55 : vector<16x128xf32>
      %c0_35 = arith.constant 0 : index
      %c0_36 = arith.constant 0 : index
      %c0_37 = arith.constant 0 : index
      %57 = vector.load %arg3[%c0_35, %c0_36, %c0_37] : memref<1x128x128xbf16, #tpu.memory_space<vmem>>, vector<1x128x128xbf16>
      %58 = vector.shape_cast %57 : vector<1x128x128xbf16> to vector<128x128xbf16>
      %59 = arith.extf %58 : vector<128x128xbf16> to vector<128x128xf32>
      %cst_38 = arith.constant dense<0.000000e+00> : vector<16x128xf32>
      %60 = tpu.matmul %56, %59, %cst_38 {dimension_numbers = #tpu.dot_dimension_numbers<[1], [0], [0], [1], [0, 0, 1, 1], [], []>} : vector<16x128xf32>, vector<128x128xf32>, vector<16x128xf32> -> vector<16x128xf32>
      %cst_39 = arith.constant 0.000000e+00 : f32
      %61 = vector.broadcast %cst_39 : f32 to vector<16x128xf32>
      %62 = arith.subf %61, %60 : vector<16x128xf32>
      %c0_40 = arith.constant 0 : index
      %c0_41 = arith.constant 0 : index
      %63 = vector.load %arg10[%c0_40, %c0_41] : memref<16x1xf32, #tpu.memory_space<vmem>>, vector<16x1xf32>
      %c0_42 = arith.constant 0 : index
      %c0_43 = arith.constant 0 : index
      %64 = vector.load %arg8[%c0_42, %c0_43] : memref<16x128xf32, #tpu.memory_space<vmem>>, vector<16x128xf32>
      %65 = vector.broadcast %63 : vector<16x1xf32> to vector<16x128xf32>
      %66 = arith.subf %65, %64 : vector<16x128xf32>
      %cst_44 = arith.constant 3.906250e-03 : f32
      %67 = vector.broadcast %cst_44 : f32 to vector<16x128xf32>
      %68 = arith.mulf %66, %67 : vector<16x128xf32>
      %c0_45 = arith.constant 0 : index
      %c0_46 = arith.constant 0 : index
      %69 = vector.load %arg9[%c0_45, %c0_46] : memref<16x128xf32, #tpu.memory_space<vmem>>, vector<16x128xf32>
      %cst_47 = arith.constant 2.000000e+00 : f32
      %70 = vector.broadcast %cst_47 : f32 to vector<16x128xf32>
      %71 = arith.mulf %70, %69 : vector<16x128xf32>
      %cst_48 = arith.constant 1.000000e+00 : f32
      %72 = vector.broadcast %cst_48 : f32 to vector<16x128xf32>
      %73 = arith.addf %71, %72 : vector<16x128xf32>
      %c0_49 = arith.constant 0 : index
      %c0_50 = arith.constant 0 : index
      %74 = vector.load %arg11[%c0_49, %c0_50] : memref<16x1xf32, #tpu.memory_space<vmem>>, vector<16x1xf32>
      %c0_51 = arith.constant 0 : index
      %c0_52 = arith.constant 0 : index
      %c0_53 = arith.constant 0 : index
      %75 = vector.load %arg6[%c0_51, %c0_52, %c0_53] : memref<1x1x128xf32, #tpu.memory_space<vmem>>, vector<1x1x128xf32>
      %76 = vector.shape_cast %75 : vector<1x1x128xf32> to vector<1x128xf32>
      %77 = vector.broadcast %74 : vector<16x1xf32> to vector<16x128xf32>
      %78 = vector.broadcast %76 : vector<1x128xf32> to vector<16x128xf32>
      %79 = arith.addf %77, %78 : vector<16x128xf32>
      %cst_54 = arith.constant 1.000000e+00 : f32
      %80 = vector.broadcast %cst_54 : f32 to vector<16x128xf32>
      %81 = arith.addf %79, %80 : vector<16x128xf32>
      %82 = arith.divf %73, %81 : vector<16x128xf32>
      %cst_55 = arith.constant 1.000000e+00 : f32
      %83 = vector.broadcast %cst_55 : f32 to vector<16x128xf32>
      %84 = arith.subf %83, %82 : vector<16x128xf32>
      %cst_56 = arith.constant 1.000000e+00 : f32
      %85 = vector.broadcast %cst_56 : f32 to vector<16x128xf32>
      %86 = arith.mulf %85, %68 : vector<16x128xf32>
      %cst_57 = arith.constant 1.000000e+00 : f32
      %87 = vector.broadcast %cst_57 : f32 to vector<16x128xf32>
      %88 = arith.mulf %87, %62 : vector<16x128xf32>
      %89 = arith.addf %86, %88 : vector<16x128xf32>
      %cst_58 = arith.constant 1.000000e+00 : f32
      %90 = vector.broadcast %cst_58 : f32 to vector<16x128xf32>
      %91 = arith.mulf %90, %84 : vector<16x128xf32>
      %92 = arith.addf %89, %91 : vector<16x128xf32>
      %c0_59 = arith.constant 0 : index
      %c0_60 = arith.constant 0 : index
      %c0_61 = arith.constant 0 : index
      %93 = vector.load %arg7[%c0_59, %c0_60, %c0_61] : memref<1x16x128xf32, #tpu.memory_space<vmem>>, vector<1x16x128xf32>
      %94 = vector.shape_cast %93 : vector<1x16x128xf32> to vector<16x128xf32>
      %95 = vector.shape_cast %92 : vector<16x128xf32> to vector<1x16x128xf32>
      tpu.vector_store %arg7[%c0_59, %c0_60, %c0_61], %95 {strides = array<i32>} : memref<1x16x128xf32, #tpu.memory_space<vmem>>, vector<1x16x128xf32>,
    } else {
    }
    return
  }
  func.func @transform_0(%arg0: i32, %arg1: i32) -> (i32, i32, i32) {
    %c0_i32 = arith.constant 0 : i32
    %c0_i32_0 = arith.constant 0 : i32
    %c0_i32_1 = arith.constant 0 : i32
    return %arg0, %c0_i32, %c0_i32_0 : i32, i32, i32
  }
  func.func @transform_1(%arg0: i32, %arg1: i32) -> (i32, i32, i32) {
    %c0_i32 = arith.constant 0 : i32
    %c0_i32_0 = arith.constant 0 : i32
    %c0_i32_1 = arith.constant 0 : i32
    return %arg0, %c0_i32, %c0_i32_0 : i32, i32, i32
  }
  func.func @transform_2(%arg0: i32, %arg1: i32) -> (i32, i32, i32) {
    %c0_i32 = arith.constant 0 : i32
    %c0_i32_0 = arith.constant 0 : i32
    return %arg0, %c0_i32, %arg1 : i32, i32, i32
  }
  func.func @transform_3(%arg0: i32, %arg1: i32) -> (i32, i32, i32) {
    %c0_i32 = arith.constant 0 : i32
    %c0_i32_0 = arith.constant 0 : i32
    return %arg0, %arg1, %c0_i32 : i32, i32, i32
  }
  func.func @transform_4(%arg0: i32, %arg1: i32) -> (i32, i32, i32) {
    %c0_i32 = arith.constant 0 : i32
    %c0_i32_0 = arith.constant 0 : i32
    %c0_i32_1 = arith.constant 0 : i32
    return %arg0, %c0_i32, %c0_i32_0 : i32, i32, i32
  }
  func.func @transform_5(%arg0: i32, %arg1: i32) -> (i32, i32, i32) {
    %c0_i32 = arith.constant 0 : i32
    %c0_i32_0 = arith.constant 0 : i32
    %c0_i32_1 = arith.constant 0 : i32
    return %arg0, %c0_i32, %c0_i32_0 : i32, i32, i32
  }
}

</mosaic_0001>

<llo_original>
// kernel: tpu_custom_call.1
$region0: #{tpu_custom_call.1}
  #allocation0 [shape = 'u32[]', space=smem, size = 0x4, offset = 0x4, fixed_abs, tag = 'smem constant byte address 0x4 - core index']
  #allocation1 [shape = 'u32[72,128]{1,0:T(1,128)}', space=vmem, size = 0x9000, scoped, tag = 'internal scratch']
  #allocation2 [shape = 'f32[16,128]{1,0:T(8,128)}', space=vmem, size = 0x2000, scoped, tag = 'scratch operand']
  #allocation3 [shape = 'f32[16,128]{1,0:T(8,128)}', space=vmem, size = 0x2000, scoped, tag = 'scratch operand']
  #allocation4 [shape = 'f32[16,1]{1,0:T(8,128)}', space=vmem, size = 0x2000, scoped, tag = 'scratch operand']
  #allocation5 [shape = 'f32[16,1]{1,0:T(8,128)}', space=vmem, size = 0x2000, scoped, tag = 'scratch operand']
  %s0 = inlined_call_operand.hbm [shape: f32[2,16,128], index: 0, kind: input, shape index: {}]
  %s1 = inlined_call_operand.hbm [shape: bf16[2,128,128], index: 1, kind: input, shape index: {}]
  %s2 = inlined_call_operand.hbm [shape: f32[2,16,256], index: 2, kind: input, shape index: {}]
  %s3 = inlined_call_operand.hbm [shape: bf16[2,256,128], index: 3, kind: input, shape index: {}]
  %s4 = inlined_call_operand.vmem [shape: f32[2,1,128], index: 4, kind: input, shape index: {}]
  %s5 = inlined_call_operand.hbm [shape: f32[2,16,128], index: 5, kind: output, shape index: {}]
  %s6 = sld [smem:[#allocation0]]
  $region77: #{tpu_custom_call.1} parent=0
    _
  %s8 = ssub.s32 1, %s6
  %s9 = scalar_select 0, %s8, %s6
  $region1: #{tpu_custom_call.1} parent=0
    #allocation6 [shape = 'u8[16384]{0}', space=vmem, size = 0x4000, scoped, tag = 'input window, operand 0']
    #allocation7 [shape = 's32[2]{0}', space=sflag, size = 0x8, scoped, tag = 'scoped memory for tpu_custom_call.1']
    #allocation8 [shape = 's32[2]{0}', space=sflag, size = 0x8, scoped, tag = 'scoped memory for tpu_custom_call.1']
    #allocation9 [shape = 'u8[65536]{0}', space=vmem, size = 0x10000, scoped, tag = 'input window, operand 1']
    #allocation10 [shape = 's32[2]{0}', space=sflag, size = 0x8, scoped, tag = 'scoped memory for tpu_custom_call.1']
    #allocation11 [shape = 'u8[16384]{0}', space=vmem, size = 0x4000, scoped, tag = 'input window, operand 2']
    #allocation12 [shape = 'u8[65536]{0}', space=vmem, size = 0x10000, scoped, tag = 'input window, operand 3']
    #allocation13 [shape = 's32[2]{0}', space=sflag, size = 0x8, scoped, tag = 'scoped memory for tpu_custom_call.1']
    #allocation14 [shape = 'u8[16384]{0}', space=vmem, size = 0x4000, scoped, tag = 'output window, operand 0']
    %10 = vsyncpa [#allocation7], 0
    %s11 = scalar_lea.sflag [#allocation7], 1
    %12 = vsyncpa %s11, 0
    %13 = vsyncpa [#allocation10], 0
    %s14 = scalar_lea.sflag [#allocation10], 1
    %15 = vsyncpa %s14, 0
    %16 = vsyncpa [#allocation13], 0
    %s17 = scalar_lea.sflag [#allocation13], 1
    %18 = vsyncpa %s17, 0
    %19 = vsyncpa [#allocation8], 0
    %s20 = scalar_lea.sflag [#allocation8], 1
    %21 = vsyncpa %s20, 0
    loop: start=0, step=1, limit=6
    $region2: #{tpu_custom_call.1} parent=1 // loop_pre_header
      _
    $region3: #{tpu_custom_call.1} parent=1 // loop_header
      %s23 = sphi 0, %s27
      %p24 = scmp.ge.s32.totalorder %s23, 6
      %s30 = sphi 0, %s42
      %s31 = sphi 0, %s38
      %s32 = sphi 0, %s30
      %s33 = sphi 0, %s31
      %s34 = sphi 0, %s32
      %s35 = sphi 0, %s33
      %s45 = sphi 0, %s47
      %s48 = sphi 0, %s45
      %s49 = sphi 0, %s48
      %s65 = sphi 0, %s49
      %s71 = sphi 0, %s73
      %s74 = sphi 0, %s71
      %s75 = sphi 0, %s74
      %s91 = sphi 0, %s75
      %s99 = sphi 0, %s101
      %s102 = sphi 0, %s99
      %s103 = sphi 0, %s102
      %s119 = sphi 0, %s103
      %s127 = sphi 0, %s129
      %s130 = sphi 0, %s127
      %s131 = sphi 0, %s130
      %s147 = sphi 0, %s131
      %s153 = sphi 0, %s155
      %s156 = sphi 0, %s153
      %s157 = sphi 0, %s156
      %s173 = sphi 0, %s157
      %s179 = sphi 0, %s181
      %s182 = sphi 0, %s179
      %s183 = sphi 0, %s182
      %s199 = sphi 0, %s183
    $region4: #{tpu_custom_call.1} parent=1 // loop_header_branch
      %26 = sbr.rel (%p24) target = $region8
    $region5: #{tpu_custom_call.1} parent=1 // loop_body
      %s28 = ssub.s32 %s23, 1
      %s29 = ssub.s32 %s23, 2
      %s36 = sadd.s32 1, %s31
      %p37 = scmp.ge.s32.totalorder %s36, 2
      %s38 = scalar_select %p37, 0, %s36
      %s39 = sadd.s32 1, %s30
      %s40 = scalar_select %p37, %s39, %s30
      %p41 = scmp.ge.s32.totalorder %s40, 2
      %s42 = scalar_select %p41, 0, %s40
      %s43 = ssub.s32 %s30, %s42
      %p44 = scmp.eq.s32.totalorder %s43, 0
      %s46 = sadd.s32 %s45, 1
      %s47 = scalar_select %p44, %s45, %s46
      %p50 = pneg %p44
      %p51 = scmp.eq.s32.totalorder %s23, 3
      %p52 = por %p50, %p51
      %p53 = scmp.ne.s32.totalorder %s45, %s48
      %p54 = scmp.eq.s32.totalorder %s23, 0
      %p55 = por %p53, %p54
      %p56 = scmp.ne.s32.totalorder %s45, %s48
      %p57 = scmp.eq.s32.totalorder %s28, 3
      %p58 = por %p56, %p57
      %p59 = scmp.ne.s32.totalorder %s48, %s49
      %p60 = scmp.eq.s32.totalorder %s28, 0
      %p61 = por %p59, %p60
      %p62 = scmp.ne.s32.totalorder %s48, %s49
      %p63 = scmp.eq.s32.totalorder %s29, 3
      %p64 = por %p62, %p63
      %p66 = scmp.ne.s32.totalorder %s49, %s65
      %p67 = scmp.eq.s32.totalorder %s29, 0
      %p68 = por %p66, %p67
      %s69 = ssub.s32 %s30, %s42
      %p70 = scmp.eq.s32.totalorder %s69, 0
      %s72 = sadd.s32 %s71, 1
      %s73 = scalar_select %p70, %s71, %s72
      %p76 = pneg %p70
      %p77 = scmp.eq.s32.totalorder %s23, 3
      %p78 = por %p76, %p77
      %p79 = scmp.ne.s32.totalorder %s71, %s74
      %p80 = scmp.eq.s32.totalorder %s23, 0
      %p81 = por %p79, %p80
      %p82 = scmp.ne.s32.totalorder %s71, %s74
      %p83 = scmp.eq.s32.totalorder %s28, 3
      %p84 = por %p82, %p83
      %p85 = scmp.ne.s32.totalorder %s74, %s75
      %p86 = scmp.eq.s32.totalorder %s28, 0
      %p87 = por %p85, %p86
      %p88 = scmp.ne.s32.totalorder %s74, %s75
      %p89 = scmp.eq.s32.totalorder %s29, 3
      %p90 = por %p88, %p89
      %p92 = scmp.ne.s32.totalorder %s75, %s91
      %p93 = scmp.eq.s32.totalorder %s29, 0
      %p94 = por %p92, %p93
      %s95 = ssub.s32 %s30, %s42
      %s96 = ssub.s32 %s31, %s38
      %s97 = sor.u32 %s95, %s96
      %p98 = scmp.eq.s32.totalorder %s97, 0
      %s100 = sadd.s32 %s99, 1
      %s101 = scalar_select %p98, %s99, %s100
      %p104 = pneg %p98
      %p105 = scmp.eq.s32.totalorder %s23, 3
      %p106 = por %p104, %p105
      %p107 = scmp.ne.s32.totalorder %s99, %s102
      %p108 = scmp.eq.s32.totalorder %s23, 0
      %p109 = por %p107, %p108
      %p110 = scmp.ne.s32.totalorder %s99, %s102
      %p111 = scmp.eq.s32.totalorder %s28, 3
      %p112 = por %p110, %p111
      %p113 = scmp.ne.s32.totalorder %s102, %s103
      %p114 = scmp.eq.s32.totalorder %s28, 0
      %p115 = por %p113, %p114
      %p116 = scmp.ne.s32.totalorder %s102, %s103
      %p117 = scmp.eq.s32.totalorder %s29, 3
      %p118 = por %p116, %p117
      %p120 = scmp.ne.s32.totalorder %s103, %s119
      %p121 = scmp.eq.s32.totalorder %s29, 0
      %p122 = por %p120, %p121
      %s123 = ssub.s32 %s30, %s42
      %s124 = ssub.s32 %s31, %s38
      %s125 = sor.u32 %s123, %s124
      %p126 = scmp.eq.s32.totalorder %s125, 0
      %s128 = sadd.s32 %s127, 1
      %s129 = scalar_select %p126, %s127, %s128
      %p132 = pneg %p126
      %p133 = scmp.eq.s32.totalorder %s23, 3
      %p134 = por %p132, %p133
      %p135 = scmp.ne.s32.totalorder %s127, %s130
      %p136 = scmp.eq.s32.totalorder %s23, 0
      %p137 = por %p135, %p136
      %p138 = scmp.ne.s32.totalorder %s127, %s130
      %p139 = scmp.eq.s32.totalorder %s28, 3
      %p140 = por %p138, %p139
      %p141 = scmp.ne.s32.totalorder %s130, %s131
      %p142 = scmp.eq.s32.totalorder %s28, 0
      %p143 = por %p141, %p142
      %p144 = scmp.ne.s32.totalorder %s130, %s131
      %p145 = scmp.eq.s32.totalorder %s29, 3
      %p146 = por %p144, %p145
      %p148 = scmp.ne.s32.totalorder %s131, %s147
      %p149 = scmp.eq.s32.totalorder %s29, 0
      %p150 = por %p148, %p149
      %s151 = ssub.s32 %s30, %s42
      %p152 = scmp.eq.s32.totalorder %s151, 0
      %s154 = sadd.s32 %s153, 1
      %s155 = scalar_select %p152, %s153, %s154
      %p158 = pneg %p152
      %p159 = scmp.eq.s32.totalorder %s23, 3
      %p160 = por %p158, %p159
      %p161 = scmp.ne.s32.totalorder %s153, %s156
      %p162 = scmp.eq.s32.totalorder %s23, 0
      %p163 = por %p161, %p162
      %p164 = scmp.ne.s32.totalorder %s153, %s156
      %p165 = scmp.eq.s32.totalorder %s28, 3
      %p166 = por %p164, %p165
      %p167 = scmp.ne.s32.totalorder %s156, %s157
      %p168 = scmp.eq.s32.totalorder %s28, 0
      %p169 = por %p167, %p168
      %p170 = scmp.ne.s32.totalorder %s156, %s157
      %p171 = scmp.eq.s32.totalorder %s29, 3
      %p172 = por %p170, %p171
      %p174 = scmp.ne.s32.totalorder %s157, %s173
      %p175 = scmp.eq.s32.totalorder %s29, 0
      %p176 = por %p174, %p175
      %s177 = ssub.s32 %s30, %s42
      %p178 = scmp.eq.s32.totalorder %s177, 0
      %s180 = sadd.s32 %s179, 1
      %s181 = scalar_select %p178, %s179, %s180
      %p184 = pneg %p178
      %p185 = scmp.eq.s32.totalorder %s23, 3
      %p186 = por %p184, %p185
      %p187 = scmp.ne.s32.totalorder %s179, %s182
      %p188 = scmp.eq.s32.totalorder %s23, 0
      %p189 = por %p187, %p188
      %p190 = scmp.ne.s32.totalorder %s179, %s182
      %p191 = scmp.eq.s32.totalorder %s28, 3
      %p192 = por %p190, %p191
      %p193 = scmp.ne.s32.totalorder %s182, %s183
      %p194 = scmp.eq.s32.totalorder %s28, 0
      %p195 = por %p193, %p194
      %p196 = scmp.ne.s32.totalorder %s182, %s183
      %p197 = scmp.eq.s32.totalorder %s29, 3
      %p198 = por %p196, %p197
      %p200 = scmp.ne.s32.totalorder %s183, %s199
      %p201 = scmp.eq.s32.totalorder %s29, 0
      %p202 = por %p200, %p201
      %p203 = scmp.le.s32.totalorder 1, %s23
      %p204 = scmp.lt.s32.totalorder %s23, 5
      %p205 = pnand %p203, %p204
      %p206 = pneg %p205
      // Predicated region
      $region9: #{tpu_custom_call.1} parent=5 // pred_check
        _
      $region10: #{tpu_custom_call.1} parent=5 // pred_check_branch
        %208 = sbr.rel (%p205) target = $region12
      $region11: #{tpu_custom_call.1} parent=5 // pred_region
        %s209 = ssub.s32 %s23, 1
      $region12: #{tpu_custom_call.1} parent=5 // pred_fallthru
        _
      %p210 = scmp.lt.s32.totalorder %s23, 4
      // Predicated region
      $region13: #{tpu_custom_call.1} parent=5 // pred_check
        %p211 = pneg %p210
      $region14: #{tpu_custom_call.1} parent=5 // pred_check_branch
        %213 = sbr.rel (%p211) target = $region16
      $region15: #{tpu_custom_call.1} parent=5 // pred_region
        // Predicated region
        $region17: #{tpu_custom_call.1} parent=15 // pred_check
          %p214 = pneg %p55
        $region18: #{tpu_custom_call.1} parent=15 // pred_check_branch
          %216 = sbr.rel (%p214) target = $region20
        $region19: #{tpu_custom_call.1} parent=15 // pred_region
          %s217 = sand.u32 %s45, 1
          %s218 = scalar_lea.sflag [#allocation7], %s217
          %s219 = sand.u32 %s45, 1
          %s220 = smul.addr %s219, 16
          %s221 = scalar_lea.vmem [#allocation6], %s220
          %223 = vsyncadd %s218, 0
          %s224 = smul.addr %s30, 2
          %s225 = smul.addr %s224, 8
          %s226 = scalar_lea.hbm %s0, %s225
          %s227 = sshll.u32 %s226, 4
          %s228 = int_to_ptr.hbm [resolvable:$true] %s227
          %s229 = sshll.u32 %s221, 4
          %s230 = int_to_ptr.vmem [resolvable:$true] %s229
          %235 = dma.hbm_to_vmem [thread:$0]  %s228, 256, %s230, %s218, 128, 128, 8
        $region20: #{tpu_custom_call.1} parent=15 // pred_fallthru
          _
        // Predicated region
        $region21: #{tpu_custom_call.1} parent=15 // pred_check
          %p236 = pneg %p81
        $region22: #{tpu_custom_call.1} parent=15 // pred_check_branch
          %238 = sbr.rel (%p236) target = $region24
        $region23: #{tpu_custom_call.1} parent=15 // pred_region
          %s239 = sand.u32 %s23, 1
          %s240 = scalar_lea.sflag [#allocation10], %s239
          %s241 = sand.u32 %s71, 1
          %s242 = smul.addr %s241, 64
          %s243 = scalar_lea.vmem [#allocation9], %s242
          %245 = vsyncadd %s240, 0
          %s246 = smul.addr %s30, 16
          %s247 = smul.addr %s246, 4
          %s248 = scalar_lea.hbm %s1, %s247
          %s249 = sshll.u32 %s248, 4
          %s250 = int_to_ptr.hbm [resolvable:$true] %s249
          %s251 = sshll.u32 %s243, 4
          %s252 = int_to_ptr.vmem [resolvable:$true] %s251
          %257 = dma.hbm_to_vmem [thread:$0]  %s250, 1024, %s252, %s240, 64, 64, 4
        $region24: #{tpu_custom_call.1} parent=15 // pred_fallthru
          _
        // Predicated region
        $region25: #{tpu_custom_call.1} parent=15 // pred_check
          %p258 = pneg %p109
        $region26: #{tpu_custom_call.1} parent=15 // pred_check_branch
          %260 = sbr.rel (%p258) target = $region28
        $region27: #{tpu_custom_call.1} parent=15 // pred_region
          %s261 = sand.u32 %s23, 1
          %s262 = scalar_lea.sflag [#allocation10], %s261
          %s263 = sand.u32 %s99, 1
          %s264 = smul.addr %s263, 16
          %s265 = scalar_lea.vmem [#allocation11], %s264
          %267 = vsyncadd %s262, 0
          %s268 = smul.addr %s30, 4
          %s269 = sadd.s32 %s31, %s268
          %s270 = smul.addr %s269, 8
          %s271 = scalar_lea.hbm %s2, %s270
          %s272 = sshll.u32 %s271, 4
          %s273 = int_to_ptr.hbm [resolvable:$true] %s272
          %s274 = sshll.u32 %s265, 4
          %s275 = int_to_ptr.vmem [resolvable:$true] %s274
          %280 = dma.hbm_to_vmem [thread:$0]  %s273, 256, %s275, %s262, 256, 128, 8
        $region28: #{tpu_custom_call.1} parent=15 // pred_fallthru
          _
        // Predicated region
        $region29: #{tpu_custom_call.1} parent=15 // pred_check
          %p281 = pneg %p137
        $region30: #{tpu_custom_call.1} parent=15 // pred_check_branch
          %283 = sbr.rel (%p281) target = $region32
        $region31: #{tpu_custom_call.1} parent=15 // pred_region
          %s284 = sand.u32 %s127, 1
          %s285 = scalar_lea.sflag [#allocation13], %s284
          %s286 = sand.u32 %s127, 1
          %s287 = smul.addr %s286, 64
          %s288 = scalar_lea.vmem [#allocation12], %s287
          %s289 = smul.u32 16, %s31
          %291 = vsyncadd %s285, 0
          %s292 = smul.addr %s30, 32
          %s293 = sadd.s32 %s289, %s292
          %s294 = smul.addr %s293, 4
          %s295 = scalar_lea.hbm %s3, %s294
          %s296 = sshll.u32 %s295, 4
          %s297 = int_to_ptr.hbm [resolvable:$true] %s296
          %s298 = sshll.u32 %s288, 4
          %s299 = int_to_ptr.vmem [resolvable:$true] %s298
          %304 = dma.hbm_to_vmem [thread:$0]  %s297, 1024, %s299, %s285, 64, 64, 4
        $region32: #{tpu_custom_call.1} parent=15 // pred_fallthru
          _
        // Predicated region
        $region33: #{tpu_custom_call.1} parent=15 // pred_check
          %p305 = pneg %p163
        $region34: #{tpu_custom_call.1} parent=15 // pred_check_branch
          %307 = sbr.rel (%p305) target = $region36
        $region35: #{tpu_custom_call.1} parent=15 // pred_region
          %p308 = scmp.lt.s32.totalorder %s30, 1
          %s309 = scalar_select %p308, %s30, 1
          %s310 = scalar_lea.vmem %s4, %s309
        $region36: #{tpu_custom_call.1} parent=15 // pred_fallthru
          _
      $region16: #{tpu_custom_call.1} parent=5 // pred_fallthru
        _
      %p311 = scmp.le.s32.totalorder 1, %s23
      %p312 = scmp.lt.s32.totalorder %s23, 5
      %p313 = pnand %p311, %p312
      %p314 = pneg %p313
      // Predicated region
      $region37: #{tpu_custom_call.1} parent=5 // pred_check
        _
      $region38: #{tpu_custom_call.1} parent=5 // pred_check_branch
        %316 = sbr.rel (%p313) target = $region40
      $region39: #{tpu_custom_call.1} parent=5 // pred_region
        %s317 = ssub.s32 %s23, 1
        %s318 = sand.u32 %s48, 1
        %s319 = scalar_lea.sflag [#allocation7], %s318
        %s320 = sand.u32 %s48, 1
        %s321 = smul.addr %s320, 16
        %s322 = scalar_lea.vmem [#allocation6], %s321
        // Predicated region
        $region41: #{tpu_custom_call.1} parent=39 // pred_check
          %p323 = pneg %p61
        $region42: #{tpu_custom_call.1} parent=39 // pred_check_branch
          %325 = sbr.rel (%p323) target = $region44
        $region43: #{tpu_custom_call.1} parent=39 // pred_region
          %327 = dma.done %s319, 256
        $region44: #{tpu_custom_call.1} parent=39 // pred_fallthru
          _
        %s328 = sand.u32 %s28, 1
        %s329 = scalar_lea.sflag [#allocation10], %s328
        %s330 = sand.u32 %s74, 1
        %s331 = smul.addr %s330, 64
        %s332 = scalar_lea.vmem [#allocation9], %s331
        // Predicated region
        $region45: #{tpu_custom_call.1} parent=39 // pred_check
          %p333 = pneg %p87
        $region46: #{tpu_custom_call.1} parent=39 // pred_check_branch
          %335 = sbr.rel (%p333) target = $region48
        $region47: #{tpu_custom_call.1} parent=39 // pred_region
          %337 = dma.done %s329, 1024
        $region48: #{tpu_custom_call.1} parent=39 // pred_fallthru
          _
        %s338 = sand.u32 %s28, 1
        %s339 = scalar_lea.sflag [#allocation10], %s338
        %s340 = sand.u32 %s102, 1
        %s341 = smul.addr %s340, 16
        %s342 = scalar_lea.vmem [#allocation11], %s341
        // Predicated region
        $region49: #{tpu_custom_call.1} parent=39 // pred_check
          %p343 = pneg %p115
        $region50: #{tpu_custom_call.1} parent=39 // pred_check_branch
          %345 = sbr.rel (%p343) target = $region52
        $region51: #{tpu_custom_call.1} parent=39 // pred_region
          %347 = dma.done %s339, 256
        $region52: #{tpu_custom_call.1} parent=39 // pred_fallthru
          _
        %s348 = sand.u32 %s130, 1
        %s349 = scalar_lea.sflag [#allocation13], %s348
        %s350 = sand.u32 %s130, 1
        %s351 = smul.addr %s350, 64
        %s352 = scalar_lea.vmem [#allocation12], %s351
        // Predicated region
        $region53: #{tpu_custom_call.1} parent=39 // pred_check
          %p353 = pneg %p143
        $region54: #{tpu_custom_call.1} parent=39 // pred_check_branch
          %355 = sbr.rel (%p353) target = $region56
        $region55: #{tpu_custom_call.1} parent=39 // pred_region
          %357 = dma.done %s349, 1024
        $region56: #{tpu_custom_call.1} parent=39 // pred_fallthru
          _
        %s358 = sand.u32 %s48, 1
        %s359 = scalar_lea.sflag [#allocation7], %s358
        %s360 = sand.u32 %s48, 1
        %s361 = smul.addr %s360, 16
        %s362 = scalar_lea.vmem [#allocation6], %s361
        %p363 = pneg %p61
        %p364 = pneg %p58
        %s365 = sand.u32 %s28, 1
        %s366 = scalar_lea.sflag [#allocation10], %s365
        %s367 = sand.u32 %s74, 1
        %s368 = smul.addr %s367, 64
        %s369 = scalar_lea.vmem [#allocation9], %s368
        %p370 = pneg %p87
        %p371 = pneg %p84
        %s372 = sand.u32 %s28, 1
        %s373 = scalar_lea.sflag [#allocation10], %s372
        %s374 = sand.u32 %s102, 1
        %s375 = smul.addr %s374, 16
        %s376 = scalar_lea.vmem [#allocation11], %s375
        %p377 = pneg %p115
        %p378 = pneg %p112
        %s379 = sand.u32 %s130, 1
        %s380 = scalar_lea.sflag [#allocation13], %s379
        %s381 = sand.u32 %s130, 1
        %s382 = smul.addr %s381, 64
        %s383 = scalar_lea.vmem [#allocation12], %s382
        %p384 = pneg %p143
        %p385 = pneg %p140
        %p386 = scmp.lt.s32.totalorder %s32, 1
        %s387 = scalar_select %p386, %s32, 1
        %s388 = scalar_lea.vmem %s4, %s387
        %p389 = pneg %p169
        %p390 = pneg %p166
        %p391 = pneg %p195
        %p392 = pneg %p192
        %s393 = sand.u32 %s182, 1
        %s394 = scalar_lea.sflag [#allocation8], %s393
        %s395 = sand.u32 %s182, 1
        %s396 = smul.addr %s395, 16
        %s397 = scalar_lea.vmem [#allocation14], %s396
        %s398 = smul.u32 16, %s33
        %p399 = scmp.lt.s32.totalorder %s32, 1
        %s400 = scalar_select %p399, %s32, 1
        %s401 = scalar_lea.vmem %s4, %s400
        %p402 = scmp.eq.s32.totalorder %s33, 0
        // Predicated region
        $region57: #{tpu_custom_call.1} parent=39 // pred_check
          %p403 = pneg %p402
        $region58: #{tpu_custom_call.1} parent=39 // pred_check_branch
          %405 = sbr.rel (%p403) target = $region60
        $region59: #{tpu_custom_call.1} parent=39 // pred_region
          %406 = vst [vmem:[#allocation2] sm:$0xff] 0.0
          %407 = vst [vmem:[#allocation2 + $0x8] sm:$0xff] 0.0
          %408 = vst [vmem:[#allocation3] sm:$0xff] 0.0
          %409 = vst [vmem:[#allocation3 + $0x8] sm:$0xff] 0.0
          %vm410 = vcmask 7168
          %411 = vst.msk [vmem:[#allocation4] sm:$0xff] %vm410, 0.0
          %412 = vst.msk [vmem:[#allocation4 + $0x8] sm:$0xff] %vm410, 0.0
          %413 = vst.msk [vmem:[#allocation5] sm:$0xff] %vm410, 0.0
          %414 = vst.msk [vmem:[#allocation5 + $0x8] sm:$0xff] %vm410, 0.0
        $region60: #{tpu_custom_call.1} parent=39 // pred_fallthru
          _
        %v415 = vld [vmem:[%s342] sm:$0xff]
        %v416 = vld [vmem:[%s342 + $0x8] sm:$0xff]
        %v417 = vld [vmem:[%s352] sm:$0xf]
        %v418 = vld [vmem:[%s352 + $0x4] sm:$0xf]
        %v419 = vld [vmem:[%s352 + $0x8] sm:$0xf]
        %v420 = vld [vmem:[%s352 + $0xc] sm:$0xf]
        %v421 = vld [vmem:[%s352 + $0x10] sm:$0xf]
        %v422 = vld [vmem:[%s352 + $0x14] sm:$0xf]
        %v423 = vld [vmem:[%s352 + $0x18] sm:$0xf]
        %v424 = vld [vmem:[%s352 + $0x1c] sm:$0xf]
        %v425 = vld [vmem:[%s352 + $0x20] sm:$0xf]
        %v426 = vld [vmem:[%s352 + $0x24] sm:$0xf]
        %v427 = vld [vmem:[%s352 + $0x28] sm:$0xf]
        %v428 = vld [vmem:[%s352 + $0x2c] sm:$0xf]
        %v429 = vld [vmem:[%s352 + $0x30] sm:$0xf]
        %v430 = vld [vmem:[%s352 + $0x34] sm:$0xf]
        %v431 = vld [vmem:[%s352 + $0x38] sm:$0xf]
        %v432 = vld [vmem:[%s352 + $0x3c] sm:$0xf]
        %v433 = vunpack.c.l.bf16 %v417
        %v434 = vunpack.c.l.bf16 %v418
        %v435 = vunpack.c.l.bf16 %v419
        %v436 = vunpack.c.l.bf16 %v420
        %v437 = vunpack.c.l.bf16 %v421
        %v438 = vunpack.c.l.bf16 %v422
        %v439 = vunpack.c.l.bf16 %v423
        %v440 = vunpack.c.l.bf16 %v424
        %v441 = vunpack.c.l.bf16 %v425
        %v442 = vunpack.c.l.bf16 %v426
        %v443 = vunpack.c.l.bf16 %v427
        %v444 = vunpack.c.l.bf16 %v428
        %v445 = vunpack.c.l.bf16 %v429
        %v446 = vunpack.c.l.bf16 %v430
        %v447 = vunpack.c.l.bf16 %v431
        %v448 = vunpack.c.l.bf16 %v432
        %v449 = vand.u32 2147483647, %v415
        %v450 = vand.u32 2147483647, %v416
        %v451 = vsub.f32 0.0, %v449
        %v452 = vsub.f32 0.0, %v450
        %v453 = vmul.f32 %v451, 1.442695
        %v454 = vpow.pop %v453
        %v455 = vmul.f32 %v452, 1.442695
        %v456 = vpow.pop %v455
        %v457 = vmax.f32 %v415, 0.0
        %v458 = vmax.f32 %v416, 0.0
        %v459 = vadd.f32 %v454, 1.0
        %v460 = vlog2.pop %v459
        %v461 = vmul.f32 %v460, 0.6931472
        %v462 = vmul.f32 -0.5, %v454
        %v463 = vadd.f32 %v462, 1.0
        %v464 = vmul.f32 %v463, %v454
        %v465 = vand.u32 2147483647, %v454
        %vm466 = vcmp.lt.f32.partialorder %v465, 0.0004427343
        %v467 = vsel %vm466, %v464, %v461
        %v468 = vadd.f32 %v456, 1.0
        %v469 = vlog2.pop %v468
        %v470 = vmul.f32 %v469, 0.6931472
        %v471 = vmul.f32 -0.5, %v456
        %v472 = vadd.f32 %v471, 1.0
        %v473 = vmul.f32 %v472, %v456
        %v474 = vand.u32 2147483647, %v456
        %vm475 = vcmp.lt.f32.partialorder %v474, 0.0004427343
        %v476 = vsel %vm475, %v473, %v470
        %v477 = vadd.f32 %v457, %v467
        %v478 = vadd.f32 %v458, %v476
        %vm479 = vcmp.ge.f32.partialorder %v415, 0.0
        %vm480 = vcmp.ge.f32.partialorder %v416, 0.0
        %v481 = vsel %vm479, 1.0, %v454
        %v482 = vsel %vm480, 1.0, %v456
        %v483 = vadd.f32 %v454, 1.0
        %v484 = vadd.f32 %v456, 1.0
        %v485 = vrcp.pop %v483
        %v486 = vmul.f32 %v483, %v485
        %v487 = vsub.f32 1.0, %v486
        %v488 = vmul.f32 %v485, %v487
        %v489 = vadd.f32 %v485, %v488
        %vm490 = vweird.f32 %v483
        %vm491 = vweird.f32 %v485
        %vm492 = vmor %vm490, %vm491
        %v493 = vsel %vm492, %v485, %v489
        %v494 = vand.u32 2147483647, %v483
        %vm495 = vcmp.eq.f32.partialorder %v494, 8.507059e+37
        %v496 = vand.u32 %v483, 2147483648
        %v497 = vor.u32 1.1754944e-38, %v496
        %v498 = vsel %vm495, %v497, %v493
        %v499 = vmul.f32 %v481, %v498
        %v500 = vrcp.pop %v484
        %v501 = vmul.f32 %v484, %v500
        %v502 = vsub.f32 1.0, %v501
        %v503 = vmul.f32 %v500, %v502
        %v504 = vadd.f32 %v500, %v503
        %vm505 = vweird.f32 %v484
        %vm506 = vweird.f32 %v500
        %vm507 = vmor %vm505, %vm506
        %v508 = vsel %vm507, %v500, %v504
        %v509 = vand.u32 2147483647, %v484
        %vm510 = vcmp.eq.f32.partialorder %v509, 8.507059e+37
        %v511 = vand.u32 %v484, 2147483648
        %v512 = vor.u32 1.1754944e-38, %v511
        %v513 = vsel %vm510, %v512, %v508
        %v514 = vmul.f32 %v482, %v513
        %515 = vmatpush.msra.mxu0 %v448
        %516 = vmatpush.msra.mxu0 %v447
        %517 = vmatpush.msra.mxu0 %v446
        %518 = vmatpush.msra.mxu0 %v445
        %519 = vmatpush.msra.mxu0 %v444
        %520 = vmatpush.msra.mxu0 %v443
        %521 = vmatpush.msra.mxu0 %v442
        %522 = vmatpush.msra.mxu0 %v441
        %523 = vmatpush.msra.mxu0 %v440
        %524 = vmatpush.msra.mxu0 %v439
        %525 = vmatpush.msra.mxu0 %v438
        %526 = vmatpush.msra.mxu0 %v437
        %527 = vmatpush.msra.mxu0 %v436
        %528 = vmatpush.msra.mxu0 %v435
        %529 = vmatpush.msra.mxu0 %v434
        %530 = vmatpush.msra.mxu0 %v433
        %531 = vmatmul.f32.gmra.mxu0 %v415
        %v532 = vpop.f32.mrf.mxu0
        %v533 = vadd.f32 0.0, %v532
        %534 = vmatmul.f32.gmra.mxu0 %v416
        %v535 = vpop.f32.mrf.mxu0
        %v536 = vadd.f32 0.0, %v535
        %537 = vmatmul.f32.gmra.mxu0 %v499
        %v538 = vpop.f32.mrf.mxu0
        %v539 = vadd.f32 0.0, %v538
        %540 = vmatmul.f32.gmra.mxu0 %v514
        %v541 = vpop.f32.mrf.mxu0
        %v542 = vadd.f32 0.0, %v541
        %543 = vdwg.mxu0
        %v544 = vld [vmem:[#allocation2] sm:$0xff]
        %v545 = vld [vmem:[#allocation2 + $0x8] sm:$0xff]
        %v546 = vadd.f32 %v544, %v533
        %v547 = vadd.f32 %v545, %v536
        %548 = vst [vmem:[#allocation2] sm:$0xff] %v546
        %549 = vst [vmem:[#allocation2 + $0x8] sm:$0xff] %v547
        %v550 = vld [vmem:[#allocation3] sm:$0xff]
        %v551 = vld [vmem:[#allocation3 + $0x8] sm:$0xff]
        %v552 = vadd.f32 %v550, %v539
        %v553 = vadd.f32 %v551, %v542
        %554 = vst [vmem:[#allocation3] sm:$0xff] %v552
        %555 = vst [vmem:[#allocation3 + $0x8] sm:$0xff] %v553
        %v556 = vld [vmem:[#allocation4] sm:$0xff]
        %v557 = vld [vmem:[#allocation4 + $0x8] sm:$0xff]
        %558 = vadd.xlane.f32.xlu0 %v477
        %v559 = vpop.xlane.xlu0 %558
        %560 = vadd.xlane.f32.xlu0 %v478
        %v561 = vpop.xlane.xlu0 %560
        %v562 = vadd.f32 %v556, %v559
        %v563 = vadd.f32 %v557, %v561
        %vm564 = vcmask 7168
        %565 = vst.msk [vmem:[#allocation4] sm:$0xff] %vm564, %v562
        %566 = vst.msk [vmem:[#allocation4 + $0x8] sm:$0xff] %vm564, %v563
        %v567 = vld [vmem:[#allocation5] sm:$0xff]
        %v568 = vld [vmem:[#allocation5 + $0x8] sm:$0xff]
        %569 = vadd.xlane.f32.xlu0 %v499
        %v570 = vpop.xlane.xlu0 %569
        %571 = vadd.xlane.f32.xlu0 %v514
        %v572 = vpop.xlane.xlu0 %571
        %v573 = vadd.f32 %v567, %v570
        %v574 = vadd.f32 %v568, %v572
        %575 = vst.msk [vmem:[#allocation5] sm:$0xff] %vm564, %v573
        %576 = vst.msk [vmem:[#allocation5 + $0x8] sm:$0xff] %vm564, %v574
        %p577 = scmp.eq.s32.totalorder %s33, 1
        // Predicated region
        $region61: #{tpu_custom_call.1} parent=39 // pred_check
          %p578 = pneg %p577
        $region62: #{tpu_custom_call.1} parent=39 // pred_check_branch
          %580 = sbr.rel (%p578) target = $region64
        $region63: #{tpu_custom_call.1} parent=39 // pred_region
          %v581 = vld [vmem:[%s322] sm:$0xff]
          %v582 = vld [vmem:[%s322 + $0x8] sm:$0xff]
          %583 = vmax.xlane.f32.xlu0 %v581
          %v584 = vpop.xlane.xlu0 %583
          %585 = vmax.xlane.f32.xlu0 %v582
          %v586 = vpop.xlane.xlu0 %585
          %v587 = vsub.f32 %v581, %v584
          %v588 = vsub.f32 %v582, %v586
          %v589 = vmul.f32 %v587, 1.442695
          %v590 = vpow.pop %v589
          %v591 = vmul.f32 %v588, 1.442695
          %v592 = vpow.pop %v591
          %593 = vadd.xlane.f32.xlu0 %v590
          %v594 = vpop.xlane.xlu0 %593
          %595 = vadd.xlane.f32.xlu0 %v592
          %v596 = vpop.xlane.xlu0 %595
          %v597 = vrcp.pop %v594
          %v598 = vmul.f32 %v594, %v597
          %v599 = vsub.f32 1.0, %v598
          %v600 = vmul.f32 %v597, %v599
          %v601 = vadd.f32 %v597, %v600
          %vm602 = vweird.f32 %v594
          %vm603 = vweird.f32 %v597
          %vm604 = vmor %vm602, %vm603
          %v605 = vsel %vm604, %v597, %v601
          %v606 = vand.u32 2147483647, %v594
          %vm607 = vcmp.eq.f32.partialorder %v606, 8.507059e+37
          %v608 = vand.u32 %v594, 2147483648
          %v609 = vor.u32 1.1754944e-38, %v608
          %v610 = vsel %vm607, %v609, %v605
          %v611 = vmul.f32 %v590, %v610
          %v612 = vrcp.pop %v596
          %v613 = vmul.f32 %v596, %v612
          %v614 = vsub.f32 1.0, %v613
          %v615 = vmul.f32 %v612, %v614
          %v616 = vadd.f32 %v612, %v615
          %vm617 = vweird.f32 %v596
          %vm618 = vweird.f32 %v612
          %vm619 = vmor %vm617, %vm618
          %v620 = vsel %vm619, %v612, %v616
          %v621 = vand.u32 2147483647, %v596
          %vm622 = vcmp.eq.f32.partialorder %v621, 8.507059e+37
          %v623 = vand.u32 %v596, 2147483648
          %v624 = vor.u32 1.1754944e-38, %v623
          %v625 = vsel %vm622, %v624, %v620
          %v626 = vmul.f32 %v592, %v625
          %v627 = vld [vmem:[%s332] sm:$0xf]
          %v628 = vld [vmem:[%s332 + $0x4] sm:$0xf]
          %v629 = vld [vmem:[%s332 + $0x8] sm:$0xf]
          %v630 = vld [vmem:[%s332 + $0xc] sm:$0xf]
          %v631 = vld [vmem:[%s332 + $0x10] sm:$0xf]
          %v632 = vld [vmem:[%s332 + $0x14] sm:$0xf]
          %v633 = vld [vmem:[%s332 + $0x18] sm:$0xf]
          %v634 = vld [vmem:[%s332 + $0x1c] sm:$0xf]
          %v635 = vld [vmem:[%s332 + $0x20] sm:$0xf]
          %v636 = vld [vmem:[%s332 + $0x24] sm:$0xf]
          %v637 = vld [vmem:[%s332 + $0x28] sm:$0xf]
          %v638 = vld [vmem:[%s332 + $0x2c] sm:$0xf]
          %v639 = vld [vmem:[%s332 + $0x30] sm:$0xf]
          %v640 = vld [vmem:[%s332 + $0x34] sm:$0xf]
          %v641 = vld [vmem:[%s332 + $0x38] sm:$0xf]
          %v642 = vld [vmem:[%s332 + $0x3c] sm:$0xf]
          %v643 = vunpack.c.l.bf16 %v627
          %v644 = vunpack.c.l.bf16 %v628
          %v645 = vunpack.c.l.bf16 %v629
          %v646 = vunpack.c.l.bf16 %v630
          %v647 = vunpack.c.l.bf16 %v631
          %v648 = vunpack.c.l.bf16 %v632
          %v649 = vunpack.c.l.bf16 %v633
          %v650 = vunpack.c.l.bf16 %v634
          %v651 = vunpack.c.l.bf16 %v635
          %v652 = vunpack.c.l.bf16 %v636
          %v653 = vunpack.c.l.bf16 %v637
          %v654 = vunpack.c.l.bf16 %v638
          %v655 = vunpack.c.l.bf16 %v639
          %v656 = vunpack.c.l.bf16 %v640
          %v657 = vunpack.c.l.bf16 %v641
          %v658 = vunpack.c.l.bf16 %v642
          %659 = vmatpush.msra.mxu0 %v658
          %660 = vmatpush.msra.mxu0 %v657
          %661 = vmatpush.msra.mxu0 %v656
          %662 = vmatpush.msra.mxu0 %v655
          %663 = vmatpush.msra.mxu0 %v654
          %664 = vmatpush.msra.mxu0 %v653
          %665 = vmatpush.msra.mxu0 %v652
          %666 = vmatpush.msra.mxu0 %v651
          %667 = vmatpush.msra.mxu0 %v650
          %668 = vmatpush.msra.mxu0 %v649
          %669 = vmatpush.msra.mxu0 %v648
          %670 = vmatpush.msra.mxu0 %v647
          %671 = vmatpush.msra.mxu0 %v646
          %672 = vmatpush.msra.mxu0 %v645
          %673 = vmatpush.msra.mxu0 %v644
          %674 = vmatpush.msra.mxu0 %v643
          %675 = vmatmul.f32.gmra.mxu0 %v611
          %v676 = vpop.f32.mrf.mxu0
          %v677 = vadd.f32 0.0, %v676
          %678 = vmatmul.f32.gmra.mxu0 %v626
          %v679 = vpop.f32.mrf.mxu0
          %v680 = vadd.f32 0.0, %v679
          %681 = vdwg.mxu0
          %v682 = vsub.f32 0.0, %v677
          %v683 = vsub.f32 0.0, %v680
          %v684 = vld [vmem:[#allocation4] sm:$0xff]
          %v685 = vld [vmem:[#allocation4 + $0x8] sm:$0xff]
          %v686 = vld [vmem:[#allocation2] sm:$0xff]
          %v687 = vld [vmem:[#allocation2 + $0x8] sm:$0xff]
          %689 = vset.pattern.permute.xlu0 0
          %690 = vperm.xlu0 %689, %v684
          %v691 = vpop.permute.xlu0 %690
          %694 = vset.pattern.permute.xlu0 0
          %695 = vperm.xlu0 %694, %v685
          %v696 = vpop.permute.xlu0 %695
          %v698 = vsub.f32 %v691, %v686
          %v699 = vsub.f32 %v696, %v687
          %v700 = vmul.f32 %v698, 0.00390625
          %v701 = vmul.f32 %v699, 0.00390625
          %v702 = vld [vmem:[#allocation3] sm:$0xff]
          %v703 = vld [vmem:[#allocation3 + $0x8] sm:$0xff]
          %v704 = vmul.f32 %v702, 2.0
          %v705 = vmul.f32 %v703, 2.0
          %v706 = vadd.f32 %v704, 1.0
          %v707 = vadd.f32 %v705, 1.0
          %v708 = vld [vmem:[#allocation5] sm:$0xff]
          %v709 = vld [vmem:[#allocation5 + $0x8] sm:$0xff]
          %v710 = vld [vmem:[%s401] sm:$0x1]
          %712 = vset.pattern.permute.xlu0 0
          %713 = vperm.xlu0 %712, %v708
          %v714 = vpop.permute.xlu0 %713
          %717 = vset.pattern.permute.xlu0 0
          %718 = vperm.xlu0 %717, %v709
          %v719 = vpop.permute.xlu0 %718
          %v722 = vperm.slane %v710, 0
          %v724 = vadd.f32 %v714, %v722
          %v725 = vadd.f32 %v719, %v722
          %v726 = vadd.f32 %v724, 1.0
          %v727 = vadd.f32 %v725, 1.0
          %v728 = vrcp.pop %v726
          %v729 = vmul.f32 %v726, %v728
          %v730 = vsub.f32 1.0, %v729
          %v731 = vmul.f32 %v728, %v730
          %v732 = vadd.f32 %v728, %v731
          %vm733 = vweird.f32 %v726
          %vm734 = vweird.f32 %v728
          %vm735 = vmor %vm733, %vm734
          %v736 = vsel %vm735, %v728, %v732
          %v737 = vand.u32 2147483647, %v726
          %vm738 = vcmp.eq.f32.partialorder %v737, 8.507059e+37
          %v739 = vand.u32 %v726, 2147483648
          %v740 = vor.u32 1.1754944e-38, %v739
          %v741 = vsel %vm738, %v740, %v736
          %v742 = vmul.f32 %v706, %v741
          %v743 = vrcp.pop %v727
          %v744 = vmul.f32 %v727, %v743
          %v745 = vsub.f32 1.0, %v744
          %v746 = vmul.f32 %v743, %v745
          %v747 = vadd.f32 %v743, %v746
          %vm748 = vweird.f32 %v727
          %vm749 = vweird.f32 %v743
          %vm750 = vmor %vm748, %vm749
          %v751 = vsel %vm750, %v743, %v747
          %v752 = vand.u32 2147483647, %v727
          %vm753 = vcmp.eq.f32.partialorder %v752, 8.507059e+37
          %v754 = vand.u32 %v727, 2147483648
          %v755 = vor.u32 1.1754944e-38, %v754
          %v756 = vsel %vm753, %v755, %v751
          %v757 = vmul.f32 %v707, %v756
          %v758 = vsub.f32 1.0, %v742
          %v759 = vsub.f32 1.0, %v757
          %v760 = vadd.f32 %v700, %v682
          %v761 = vadd.f32 %v701, %v683
          %v762 = vadd.f32 %v760, %v758
          %v763 = vadd.f32 %v761, %v759
          %764 = vst [vmem:[%s397] sm:$0xff] %v762
          %765 = vst [vmem:[%s397 + $0x8] sm:$0xff] %v763
        $region64: #{tpu_custom_call.1} parent=39 // pred_fallthru
          _
        %s766 = sand.u32 %s182, 1
        %s767 = scalar_lea.sflag [#allocation8], %s766
        %s768 = sand.u32 %s182, 1
        %s769 = smul.addr %s768, 16
        %s770 = scalar_lea.vmem [#allocation14], %s769
        // Predicated region
        $region65: #{tpu_custom_call.1} parent=39 // pred_check
          %p771 = pneg %p192
        $region66: #{tpu_custom_call.1} parent=39 // pred_check_branch
          %773 = sbr.rel (%p771) target = $region68
        $region67: #{tpu_custom_call.1} parent=39 // pred_region
          %775 = vsyncadd %s767, 0
          %s776 = smul.addr %s32, 2
          %s777 = smul.addr %s776, 8
          %s778 = scalar_lea.hbm %s5, %s777
          %s779 = sshll.u32 %s770, 4
          %s780 = int_to_ptr.vmem [resolvable:$true] %s779
          %s781 = sshll.u32 %s778, 4
          %s782 = int_to_ptr.hbm [resolvable:$true] %s781
          %787 = dma.vmem_to_hbm [thread:$0]  %s780, 256, %s782, %s767, 128, 128, 8
        $region68: #{tpu_custom_call.1} parent=39 // pred_fallthru
          _
      $region40: #{tpu_custom_call.1} parent=5 // pred_fallthru
        _
      %p788 = scmp.le.s32.totalorder 2, %s23
      // Predicated region
      $region69: #{tpu_custom_call.1} parent=5 // pred_check
        %p789 = pneg %p788
      $region70: #{tpu_custom_call.1} parent=5 // pred_check_branch
        %791 = sbr.rel (%p789) target = $region72
      $region71: #{tpu_custom_call.1} parent=5 // pred_region
        %s792 = ssub.s32 %s23, 2
        // Predicated region
        $region73: #{tpu_custom_call.1} parent=71 // pred_check
          %p793 = pneg %p198
        $region74: #{tpu_custom_call.1} parent=71 // pred_check_branch
          %795 = sbr.rel (%p793) target = $region76
        $region75: #{tpu_custom_call.1} parent=71 // pred_region
          %s796 = sand.u32 %s183, 1
          %s797 = scalar_lea.sflag [#allocation8], %s796
          %s798 = sand.u32 %s183, 1
          %s799 = smul.addr %s798, 16
          %s800 = scalar_lea.vmem [#allocation14], %s799
          %802 = dma.done %s797, 256
        $region76: #{tpu_custom_call.1} parent=71 // pred_fallthru
          _
      $region72: #{tpu_custom_call.1} parent=5 // pred_fallthru
        _
    $region6: #{tpu_custom_call.1} parent=1 // loop_footer
      %s27 = sadd.s32 1, %s23
    $region7: #{tpu_custom_call.1} parent=1 // loop_footer_branch
      %22 = sbr.rel target = $region3
    $region8: #{tpu_custom_call.1} parent=1 // loop_exit
      _
    %803 = vsyncpa [#allocation7], 1
    %s804 = scalar_lea.sflag [#allocation7], 1
    %805 = vsyncpa %s804, 1
    %806 = vsyncpa [#allocation10], 1
    %s807 = scalar_lea.sflag [#allocation10], 1
    %808 = vsyncpa %s807, 1
    %809 = vsyncpa [#allocation13], 1
    %s810 = scalar_lea.sflag [#allocation13], 1
    %811 = vsyncpa %s810, 1
    %812 = vsyncpa [#allocation8], 1
    %s813 = scalar_lea.sflag [#allocation8], 1
    %814 = vsyncpa %s813, 1

</llo_original>
